<compile_context>
chip_gen: v7x
topology: tpu7x:2x2x1
jax: 0.10.0
libtpu: 0.0.40
codegen_flags: <defaults>
</compile_context>

<pallas_src>
import jax
import jax.numpy as jnp
from jax.experimental import pallas as pl
from jax.experimental.pallas import tpu as pltpu


_TARGET_TILE_BYTES = 4 * 1024 * 1024      # ~4 MiB tiles: roofline plateau on all gens
_VMEM_LIMIT_BYTES = 32 * 1024 * 1024      # covers 2x(in+out) double-buffering + params
_SUBLANE_ALIGN = {4: 8, 2: 16, 1: 32}     # itemsize -> sublane packing alignment


def _frozen_bn_kernel(scale_ref, shift_ref, x_ref, o_ref):
    # x_ref / o_ref: (blk_r, blk_l); scale/shift: (blk_r, 1) or (1, blk_l) f32.
    x = x_ref[...].astype(jnp.float32)
    o_ref[...] = (x * scale_ref[...] + shift_ref[...]).astype(o_ref.dtype)


def _round_down(v, m):
    return (v // m) * m


def frozen_batch_norm_2d(x, weight, bias, running_mean, running_var, eps=1e-5,
                         *, target_tile_bytes=_TARGET_TILE_BYTES):
    """FrozenBatchNorm2d forward. x: (N, C, H, W); params: (C,)."""
    N, C, H, W = x.shape
    HW = H * W

    # Fold the frozen statistics once (f32 for accuracy).
    scale_c = (weight.astype(jnp.float32)
               * jax.lax.rsqrt(running_var.astype(jnp.float32) + jnp.float32(eps)))
    shift_c = bias.astype(jnp.float32) - running_mean.astype(jnp.float32) * scale_c

    # Pick a lane-dense 2-D view (R rows, L lanes) + broadcastable params.
    if HW % 128 == 0 or (C * HW) % 128 != 0:
        # Per-(n, c)-row params. Also the fallback when nothing is lane-dense.
        R, L = N * C, HW
        x2 = x.reshape(R, L)
        scale2 = jnp.tile(scale_c, N).reshape(R, 1)
        shift2 = jnp.tile(shift_c, N).reshape(R, 1)
        params_per_row = True
    else:
        # HW ragged but C*HW lane-dense: rows are images, per-element params.
        R, L = N, C * HW
        x2 = x.reshape(R, L)
        scale2 = jnp.repeat(scale_c, HW).reshape(1, L)
        shift2 = jnp.repeat(shift_c, HW).reshape(1, L)
        params_per_row = False

    itemsize = jnp.dtype(x.dtype).itemsize
    sub_align = _SUBLANE_ALIGN.get(itemsize, 8)
    target_elems = max(128, target_tile_bytes // itemsize)

    # Lane (last-dim) block: large multiple of 128; cdiv boundary handles the rest.
    min_r = sub_align if R >= sub_align else R
    lane_budget = max(128, target_elems // max(1, min_r))
    if L < 128:
        blk_l = L                                   # tiny array: full (masked) lane dim
    else:
        blk_l = max(128, min(_round_down(L, 128), _round_down(lane_budget, 128)))

    # Row (second-to-last dim) block: fold batch/channels up to the tile budget.
    max_r = max(1, target_elems // blk_l)
    if max_r >= R or R <= sub_align:
        blk_r = R
    else:
        blk_r = max(sub_align, _round_down(max_r, sub_align))

    grid_r = pl.cdiv(R, blk_r)
    grid_l = pl.cdiv(L, blk_l)

    # Largest-extent parallel axis first (v7x megacore: both cores get work).
    if grid_r >= grid_l:
        grid = (grid_r, grid_l)

        def x_map(r, l):
            return (r, l)

        def p_map(r, l):
            return (r, 0) if params_per_row else (0, l)
    else:
        grid = (grid_l, grid_r)

        def x_map(l, r):
            return (r, l)

        def p_map(l, r):
            return (r, 0) if params_per_row else (0, l)

    p_blk = (blk_r, 1) if params_per_row else (1, blk_l)
    x_blk = (blk_r, blk_l)

    out2 = pl.pallas_call(
        _frozen_bn_kernel,
        out_shape=jax.ShapeDtypeStruct((R, L), x.dtype),
        grid_spec=pltpu.PrefetchScalarGridSpec(
            num_scalar_prefetch=0,
            grid=grid,
            in_specs=[pl.BlockSpec(p_blk, p_map),
                      pl.BlockSpec(p_blk, p_map),
                      pl.BlockSpec(x_blk, x_map)],
            out_specs=pl.BlockSpec(x_blk, x_map),
        ),
        compiler_params=pltpu.CompilerParams(
            dimension_semantics=("parallel", "parallel"),
            vmem_limit_bytes=_VMEM_LIMIT_BYTES,
        ),
        cost_estimate=pl.CostEstimate(
            flops=2 * x.size,
            transcendentals=0,
            bytes_accessed=2 * x.size * itemsize + 2 * scale2.size * 4,
        ),
    )(scale2, shift2, x2)

    return out2.reshape(N, C, H, W)


def _reference(x, weight, bias, running_mean, running_var, eps):
    # Mirrors the PyTorch FrozenBatchNorm2d forward (computed in f32).
    w4 = weight.reshape(1, -1, 1, 1).astype(jnp.float32)
    b4 = bias.reshape(1, -1, 1, 1).astype(jnp.float32)
    rv4 = running_var.reshape(1, -1, 1, 1).astype(jnp.float32)
    rm4 = running_mean.reshape(1, -1, 1, 1).astype(jnp.float32)
    scale = w4 * jax.lax.rsqrt(rv4 + jnp.float32(eps))
    return (x.astype(jnp.float32) * scale + (b4 - rm4 * scale)).astype(x.dtype)


def _run_case(key, shape, dtype, tile_bytes, atol):
    N, C, H, W = shape
    kx, kw, kb, km, kv = jax.random.split(key, 5)
    x = jax.random.normal(kx, shape, dtype=jnp.float32).astype(dtype)
    weight = 1.0 + 0.1 * jax.random.normal(kw, (C,), dtype=jnp.float32)
    bias = 0.1 * jax.random.normal(kb, (C,), dtype=jnp.float32)
    running_mean = 0.05 * jax.random.normal(km, (C,), dtype=jnp.float32)
    running_var = 1.0 + 0.1 * jnp.abs(jax.random.normal(kv, (C,), dtype=jnp.float32))
    eps = 1e-5

    out = frozen_batch_norm_2d(x, weight, bias, running_mean, running_var, eps,
                               target_tile_bytes=tile_bytes)
    out = jax.block_until_ready(out)
    ref = _reference(x, weight, bias, running_mean, running_var, eps)

    assert out.shape == ref.shape and out.dtype == x.dtype
    assert jnp.allclose(out.astype(jnp.float32), ref.astype(jnp.float32),
                        atol=atol, rtol=atol), f"mismatch for shape={shape} dtype={dtype}"


if __name__ == "__main__":
    key = jax.random.PRNGKey(0)
    k1, k2, k3, k4 = jax.random.split(key, 4)

    # 1) Single-block, lane-dense (HW % 128 == 0) path.
    _run_case(k1, (2, 4, 16, 16), jnp.float32, _TARGET_TILE_BYTES, 1e-5)
    # 2) Multi-block rows (C % 8 == 0, HW multiple of 128); small tile forces tiling.
    _run_case(k2, (2, 16, 32, 32), jnp.float32, 64 * 1024, 1e-5)
    # 3) Ragged HW (12x12 -> 144): lane-dense via C*HW, partial boundary block + grid swap.
    _run_case(k3, (2, 8, 12, 12), jnp.float32, 4 * 1024, 1e-5)
    # 4) bf16 inputs (sublane packing alignment 16).
    _run_case(k4, (2, 16, 16, 16), jnp.bfloat16, _TARGET_TILE_BYTES, 5e-2)

    print("KERNEL_OK")
</pallas_src>

<mosaic_0001>
module attributes {stable_mosaic.version = 11 : i64} {
  func.func @_frozen_bn_kernel(%arg0: i32, %arg1: i32, %arg2: memref<8x1xf32, #tpu.memory_space<vmem>>, %arg3: memref<8x1xf32, #tpu.memory_space<vmem>>, %arg4: memref<8x256xf32, #tpu.memory_space<vmem>>, %arg5: memref<8x256xf32, #tpu.memory_space<vmem>>) attributes {dimension_semantics = [#tpu.dimension_semantics<parallel>, #tpu.dimension_semantics<parallel>], iteration_bounds = array<i64: 1, 1>, scalar_prefetch = 0 : i64, scratch_operands = 0 : i64, tpu.core_type = #tpu.core_type<tc>, window_params = [{transform_indices = @transform_0, window_bounds = array<i64: 8, 1>}, {transform_indices = @transform_1, window_bounds = array<i64: 8, 1>}, {transform_indices = @transform_2, window_bounds = array<i64: 8, 256>}, {transform_indices = @transform_3, window_bounds = array<i64: 8, 256>}]} {
    %c0 = arith.constant 0 : index
    %c0_0 = arith.constant 0 : index
    %0 = vector.load %arg4[%c0, %c0_0] : memref<8x256xf32, #tpu.memory_space<vmem>>, vector<8x256xf32>
    %c0_1 = arith.constant 0 : index
    %c0_2 = arith.constant 0 : index
    %1 = vector.load %arg2[%c0_1, %c0_2] : memref<8x1xf32, #tpu.memory_space<vmem>>, vector<8x1xf32>
    %2 = vector.broadcast %1 : vector<8x1xf32> to vector<8x256xf32>
    %3 = arith.mulf %0, %2 : vector<8x256xf32>
    %c0_3 = arith.constant 0 : index
    %c0_4 = arith.constant 0 : index
    %4 = vector.load %arg3[%c0_3, %c0_4] : memref<8x1xf32, #tpu.memory_space<vmem>>, vector<8x1xf32>
    %5 = vector.broadcast %4 : vector<8x1xf32> to vector<8x256xf32>
    %6 = arith.addf %3, %5 : vector<8x256xf32>
    %c0_5 = arith.constant 0 : index
    %c0_6 = arith.constant 0 : index
    %7 = vector.load %arg5[%c0_5, %c0_6] : memref<8x256xf32, #tpu.memory_space<vmem>>, vector<8x256xf32>
    tpu.vector_store %arg5[%c0_5, %c0_6], %6 {strides = array<i32>} : memref<8x256xf32, #tpu.memory_space<vmem>>, vector<8x256xf32>,
    return
  }
  func.func @transform_0(%arg0: i32, %arg1: i32) -> (i32, i32) {
    %c0_i32 = arith.constant 0 : i32
    %c0_i32_0 = arith.constant 0 : i32
    return %arg0, %c0_i32 : i32, i32
  }
  func.func @transform_1(%arg0: i32, %arg1: i32) -> (i32, i32) {
    %c0_i32 = arith.constant 0 : i32
    %c0_i32_0 = arith.constant 0 : i32
    return %arg0, %c0_i32 : i32, i32
  }
  func.func @transform_2(%arg0: i32, %arg1: i32) -> (i32, i32) {
    %c0_i32 = arith.constant 0 : i32
    return %arg0, %arg1 : i32, i32
  }
  func.func @transform_3(%arg0: i32, %arg1: i32) -> (i32, i32) {
    %c0_i32 = arith.constant 0 : i32
    return %arg0, %arg1 : i32, i32
  }
}

</mosaic_0001>

<llo_original>
// kernel: tpu_custom_call.1
$region0: #{tpu_custom_call.1}
  #allocation0 [shape = 'u32[]', space=smem, size = 0x4, offset = 0x4, fixed_abs, tag = 'smem constant byte address 0x4 - core index']
  #allocation1 [shape = 'u32[144,128]{1,0:T(1,128)}', space=vmem, size = 0x12000, scoped, tag = 'internal scratch']
  %s0 = inlined_call_operand.vmem [shape: f32[8,1], index: 0, kind: input, shape index: {}]
  %s1 = inlined_call_operand.vmem [shape: f32[8,1], index: 1, kind: input, shape index: {}]
  %s2 = inlined_call_operand.vmem [shape: f32[8,256], index: 2, kind: input, shape index: {}]
  %s3 = inlined_call_operand.hbm [shape: f32[8,256], index: 3, kind: output, shape index: {}]
  %s4 = sld [smem:[#allocation0]]
  $region22: #{tpu_custom_call.1} parent=0
    _
  %s6 = ssub.s32 1, %s4
  %s7 = scalar_select 0, %s6, %s4
  $region1: #{tpu_custom_call.1} parent=0
    #allocation2 [shape = 'u8[8192]{0}', space=vmem, size = 0x2000, scoped, tag = 'output window, operand 0, single buffered']
    #allocation3 [shape = 's32[1]{0}', space=sflag, size = 0x4, scoped, tag = 'scoped memory for tpu_custom_call.1']
    %8 = vsyncpa [#allocation3], 0
    // Predicated region
    $region2: #{tpu_custom_call.1} parent=1 // pred_check
      _
    $region3: #{tpu_custom_call.1} parent=1 // pred_check_branch
      %10 = sbr.rel (0) target = $region5
    $region4: #{tpu_custom_call.1} parent=1 // pred_region
      _
    $region5: #{tpu_custom_call.1} parent=1 // pred_fallthru
      _
    // Predicated region
    $region6: #{tpu_custom_call.1} parent=1 // pred_check
      _
    $region7: #{tpu_custom_call.1} parent=1 // pred_check_branch
      %12 = sbr.rel (0) target = $region9
    $region8: #{tpu_custom_call.1} parent=1 // pred_region
      _
    $region9: #{tpu_custom_call.1} parent=1 // pred_fallthru
      _
    // Predicated region
    $region10: #{tpu_custom_call.1} parent=1 // pred_check
      _
    $region11: #{tpu_custom_call.1} parent=1 // pred_check_branch
      %14 = sbr.rel (0) target = $region13
    $region12: #{tpu_custom_call.1} parent=1 // pred_region
      _
    $region13: #{tpu_custom_call.1} parent=1 // pred_fallthru
      _
    %v15 = vld [vmem:[%s2] sm:$0xff]
    %v16 = vld [vmem:[%s2 + $0x8] sm:$0xff]
    %v17 = vld [vmem:[%s0] sm:$0xff]
    %19 = vset.pattern.permute.xlu0 0
    %20 = vperm.xlu0 %19, %v17
    %v21 = vpop.permute.xlu0 %20
    %v23 = vmul.f32 %v15, %v21
    %v24 = vmul.f32 %v16, %v21
    %v25 = vld [vmem:[%s1] sm:$0xff]
    %27 = vset.pattern.permute.xlu0 0
    %28 = vperm.xlu0 %27, %v25
    %v29 = vpop.permute.xlu0 %28
    %v31 = vadd.f32 %v23, %v29
    %v32 = vadd.f32 %v24, %v29
    %33 = vst [vmem:[#allocation2] sm:$0xff] %v31
    %34 = vst [vmem:[#allocation2 + $0x8] sm:$0xff] %v32
    // Predicated region
    $region14: #{tpu_custom_call.1} parent=1 // pred_check
      _
    $region15: #{tpu_custom_call.1} parent=1 // pred_check_branch
      %36 = sbr.rel (0) target = $region17
    $region16: #{tpu_custom_call.1} parent=1 // pred_region
      %s38 = ssub.s32 256, 256
      %39 = vsyncadd [#allocation3], %s38
      %s41 = sshll.u32 [#allocation2], 4
      %s42 = int_to_ptr.vmem [resolvable:$true] %s41
      %44 = dma.vmem_to_hbm [thread:$0]  %s42, 256, %s3, [#allocation3]
    $region17: #{tpu_custom_call.1} parent=1 // pred_fallthru
      _
    // Predicated region
    $region18: #{tpu_custom_call.1} parent=1 // pred_check
      _
    $region19: #{tpu_custom_call.1} parent=1 // pred_check_branch
      %46 = sbr.rel (0) target = $region21
    $region20: #{tpu_custom_call.1} parent=1 // pred_region
      %47 = dma.done [#allocation3], 256
    $region21: #{tpu_custom_call.1} parent=1 // pred_fallthru
      _
    %48 = vsyncpa [#allocation3], 1

</llo_original>
